<compile_context>
chip_gen: v7x
topology: tpu7x:2x2x1
jax: 0.10.0
libtpu: 0.0.40
codegen_flags: <defaults>
</compile_context>

<pallas_src>
import functools

import jax
import jax.numpy as jnp
from jax.experimental import pallas as pl
from jax.experimental.pallas import tpu as pltpu


def _lsh_kernel(x_ref, r_ref, out_ref, *, rounds, half_buckets, seq_len, l_tile):
    """One (batch, L-tile) grid step.

    x_ref:   [1, TL, D]  input positions (native [B, L, D] layout)
    r_ref:   [1, RH, D]  pre-normalized projection rows (RH = rounds * Hh)
    out_ref: [1, R,  TL] int32 hashes (lane-dense along L)
    """
    x = x_ref[0]                        # [TL, D]
    r = r_ref[0]                        # [RH, D]
    Hh = half_buckets
    TL = l_tile

    # m[i, j] = sum_d r[i, d] * x[j, d] -> [RH, TL]; MXU NT contraction over D,
    # f32 accumulation.  F.normalize(inp) is intentionally omitted: a positive
    # per-row scale of x cannot change the per-column argmax.
    m = jax.lax.dot_general(
        r, x, dimension_numbers=(((1,), (1,)), ((), ())),
        preferred_element_type=jnp.float32)

    # Concat-free argmax over cat([m, -m]) with exact first-occurrence ties:
    # v = max(|m|); candidates are iota where m==v (positive half, lower concat
    # index) and iota+Hh where m==-v; a single min-reduce picks the first.
    # (v==0 resolves to the first zero of the positive half, as torch does.)
    big = jnp.int32(2 * Hh)
    iota = jax.lax.broadcasted_iota(jnp.int32, (Hh, TL), 0)          # hoisted
    pos = (pl.program_id(1) * TL
           + jax.lax.broadcasted_iota(jnp.int32, (1, TL), 1))        # [1, TL]
    length = jnp.int32(seq_len)

    for rd in range(rounds):
        # Sublane slice: free when Hh is a multiple of 8 (f32 sublane tile);
        # other Hh still correct, just pays a relayout copy per round.
        mr = m[rd * Hh:(rd + 1) * Hh, :]                             # [Hh, TL]
        v = jnp.max(jnp.abs(mr), axis=0, keepdims=True)              # [1, TL]
        idx = jnp.where(mr == v, iota,
                        jnp.where(mr == -v, iota + Hh, big))
        row = jnp.min(idx, axis=0, keepdims=True)                    # [1, TL]
        # Direct per-round store; no concatenate / sublane repack.
        out_ref[0, pl.ds(rd, 1), :] = row * length + pos


def _choose_l_tile(L, D, x_itemsize, rounds, max_tile=2048, vmem_budget=8 << 20):
    """Pick the lane tile along L.

    Cap so triple-buffered x blocks + double-buffered out blocks stay well under
    the scoped VMEM limit on every chip (v7x has the smallest VMEM).  Prefer a
    multiple-of-128 divisor of L; otherwise fall back to a multiple-of-128 tile
    with a cdiv grid and a masked last tile (never a silent full-L block).
    """
    per_l = 3 * D * x_itemsize + 2 * rounds * 4
    cap = min(max_tile, max(128, (vmem_budget // per_l) // 128 * 128))
    if L <= cap:
        return L
    for t in range(cap, 127, -128):
        if L % t == 0:
            return t
    return cap                                  # masked last tile via cdiv grid


def lsh_hash(inp, rand_matrix, *, compute_dtype=jnp.float32, max_l_tile=2048):
    """inp: [B, L, D] f32, rand_matrix: [B, D, R, Hh] f32 -> [B, L, R] int32.

    compute_dtype=jnp.bfloat16 halves the HBM bytes of the dominant x stream
    (useful on bandwidth-poor v5e, and only when the cast fuses into x's
    producer); the MXU still accumulates in f32.  Near-tie hashes may differ
    from the strict f32 path, so the default stays f32.
    """
    B, L, D = inp.shape
    _, D2, R, Hh = rand_matrix.shape
    assert D == D2
    RH = R * Hh

    x = inp
    if jnp.dtype(compute_dtype) != jnp.dtype(jnp.float32):
        # NOTE: only a win when this cast fuses into x's producer; standalone it
        # adds an extra HBM pass over x.
        x = x.astype(compute_dtype)

    # Projection rows as [B, RH, D]; row-normalize ONCE here (hoisted out of the
    # kernel, where it was recomputed every grid step).  rand_matrix is tiny
    # (RH*D per batch) so this costs nothing vs. the x stream.
    rT = jnp.transpose(rand_matrix, (0, 2, 3, 1)).reshape(B, RH, D)
    rT = rT * jax.lax.rsqrt(jnp.sum(rT * rT, axis=-1, keepdims=True))
    rT = rT.astype(x.dtype)

    TL = _choose_l_tile(L, D, jnp.dtype(x.dtype).itemsize, R, max_l_tile)
    n_lt = pl.cdiv(L, TL)

    kernel = functools.partial(
        _lsh_kernel, rounds=R, half_buckets=Hh, seq_len=L, l_tile=TL)

    # Deeper buffering on the dominant x stream (blocks are tiny vs VMEM); only
    # requested when there are enough grid steps for it to matter.
    x_spec_kwargs = {}
    if B * n_lt >= 3:
        x_spec_kwargs["pipeline_mode"] = pl.Buffered(3)
    x_spec = pl.BlockSpec((1, TL, D), lambda b, lt: (b, lt, 0), **x_spec_kwargs)

    out_rl = pl.pallas_call(
        kernel,
        out_shape=jax.ShapeDtypeStruct((B, R, L), jnp.int32),
        grid_spec=pltpu.PrefetchScalarGridSpec(
            num_scalar_prefetch=0,
            grid=(B, n_lt),
            in_specs=[
                x_spec,
                # constant block index across the L axis -> r not re-fetched
                pl.BlockSpec((1, RH, D), lambda b, lt: (b, 0, 0)),
            ],
            out_specs=pl.BlockSpec((1, R, TL), lambda b, lt: (b, 0, lt)),
        ),
        compiler_params=pltpu.CompilerParams(
            dimension_semantics=("parallel", "parallel")),
    )(x, rT)

    # Keep the kernel output lane-dense [B, R, L]; do the torch-layout
    # transpose in XLA (an R=4-wide minor dim out_spec would force masked
    # partial stores).  Fuse/push into the consumer where possible.
    return jnp.swapaxes(out_rl, 1, 2)                                # [B, L, R]


def lsh_ref(inp, rand_matrix):
    """Pure-JAX mirror of the PyTorch forward, plus the top-2 margin of the
    concatenated projections (for tolerance-aware near-tie comparison)."""
    x = inp / jnp.maximum(jnp.linalg.norm(inp, axis=-1, keepdims=True), 1e-12)
    r = rand_matrix / jnp.linalg.norm(rand_matrix, axis=1, keepdims=True)
    m = jnp.einsum('bij,bjkl->bikl', x, r)                   # [B, L, R, Hh]
    cat = jnp.concatenate([m, -m], axis=-1)                  # [B, L, R, 2*Hh]
    h = jnp.argmax(cat, axis=-1).astype(jnp.int32)
    L = inp.shape[1]
    hashes = h * jnp.int32(L) + jnp.arange(L, dtype=jnp.int32)[None, :, None]
    top2 = jax.lax.top_k(cat, 2)[0]
    margin = top2[..., 0] - top2[..., 1]                     # [B, L, R]
    return hashes, margin


if __name__ == "__main__":
    def check(B, L, D, rounds, n_buckets):
        Hh = n_buckets // 2
        key = jax.random.PRNGKey(0)
        k_inp, k_rand = jax.random.split(key)
        inp = jax.random.normal(k_inp, (B, L, D), dtype=jnp.float32)
        rand_matrix = jax.random.normal(
            k_rand, (B, D, rounds, Hh), dtype=jnp.float32)
        out = jax.block_until_ready(lsh_hash(inp, rand_matrix))
        ref, margin = lsh_ref(inp, rand_matrix)
        assert out.shape == (B, L, rounds) and out.dtype == jnp.int32
        # Tolerance-aware comparison: the kernel skips input normalization and
        # uses MXU accumulation, so only require agreement where the reference
        # argmax is not a near-tie in the unit-normalized projections.
        ok = (out == ref) | (margin < 1e-4)
        assert bool(jnp.all(ok)), "Pallas kernel mismatch vs JAX reference"
        return inp, rand_matrix

    # Small shapes consistent with the module: d_k = d_model // head = 32,
    # rounds = 4, n_buckets = 16 (-> half = 8), batch = 2, length = 8.
    inp, rand_matrix = check(B=2, L=8, D=32, rounds=4, n_buckets=16)

    # bf16 x-stream variant (HBM-bandwidth option on v5e); near-tie hashes may
    # legitimately differ from f32, so shape/dtype smoke test only.
    out_bf16 = jax.block_until_ready(
        lsh_hash(inp, rand_matrix, compute_dtype=jnp.bfloat16))
    assert out_bf16.shape == (2, 8, 4) and out_bf16.dtype == jnp.int32

    # Larger L exercising multi-tile pipelining (Buffered(3) on x) and the
    # masked last tile of the cdiv grid (2112 has no x128 divisor <= 2048).
    check(B=2, L=2112, D=32, rounds=4, n_buckets=16)

    print("KERNEL_OK")
</pallas_src>

<mosaic_0001>
module attributes {stable_mosaic.version = 11 : i64} {
  func.func @_lsh_kernel(%arg0: i32, %arg1: i32, %arg2: memref<1x8x32xf32, #tpu.memory_space<vmem>>, %arg3: memref<1x32x32xf32, #tpu.memory_space<vmem>>, %arg4: memref<1x4x8xi32, #tpu.memory_space<vmem>>) attributes {dimension_semantics = [#tpu.dimension_semantics<parallel>, #tpu.dimension_semantics<parallel>], iteration_bounds = array<i64: 2, 1>, scalar_prefetch = 0 : i64, scratch_operands = 0 : i64, tpu.core_type = #tpu.core_type<tc>, window_params = [{transform_indices = @transform_0, window_bounds = array<i64: 1, 8, 32>}, {transform_indices = @transform_1, window_bounds = array<i64: 1, 32, 32>}, {transform_indices = @transform_2, window_bounds = array<i64: 1, 4, 8>}]} {
    %c0 = arith.constant 0 : index
    %c0_0 = arith.constant 0 : index
    %c0_1 = arith.constant 0 : index
    %0 = vector.load %arg2[%c0, %c0_0, %c0_1] : memref<1x8x32xf32, #tpu.memory_space<vmem>>, vector<1x8x32xf32>
    %1 = vector.shape_cast %0 : vector<1x8x32xf32> to vector<8x32xf32>
    %c0_2 = arith.constant 0 : index
    %c0_3 = arith.constant 0 : index
    %c0_4 = arith.constant 0 : index
    %2 = vector.load %arg3[%c0_2, %c0_3, %c0_4] : memref<1x32x32xf32, #tpu.memory_space<vmem>>, vector<1x32x32xf32>
    %3 = vector.shape_cast %2 : vector<1x32x32xf32> to vector<32x32xf32>
    %cst = arith.constant dense<0.000000e+00> : vector<32x8xf32>
    %4 = tpu.matmul %3, %1, %cst {dimension_numbers = #tpu.dot_dimension_numbers<[1], [1], [0], [0], [0, 0, 1, 0], [], []>} : vector<32x32xf32>, vector<8x32xf32>, vector<32x8xf32> -> vector<32x8xf32>
    %5 = tpu.iota {dimensions = array<i32: 0>} : vector<8x8xi32>
    %c8_i32 = arith.constant 8 : i32
    %6 = arith.muli %arg1, %c8_i32 : i32
    %7 = tpu.iota {dimensions = array<i32: 1>} : vector<1x8xi32>
    %8 = vector.broadcast %6 : i32 to vector<1x8xi32>
    %9 = arith.addi %8, %7 : vector<1x8xi32>
    %10 = vector.extract_strided_slice %4 {offsets = [0, 0], sizes = [8, 8], strides = [1, 1]} : vector<32x8xf32> to vector<8x8xf32>
    %11 = math.absf %10 : vector<8x8xf32>
    %cst_5 = arith.constant dense<0xFF800000> : vector<8xf32>
    %12 = vector.multi_reduction <maximumf>, %11, %cst_5 [0] : vector<8x8xf32> to vector<8xf32>
    %13 = vector.shape_cast %12 : vector<8xf32> to vector<1x8xf32>
    %14 = vector.broadcast %13 : vector<1x8xf32> to vector<8x8xf32>
    %15 = arith.cmpf oeq, %10, %14 : vector<8x8xf32>
    %cst_6 = arith.constant 0.000000e+00 : f32
    %16 = vector.broadcast %cst_6 : f32 to vector<1x8xf32>
    %17 = arith.subf %16, %13 : vector<1x8xf32>
    %18 = vector.broadcast %17 : vector<1x8xf32> to vector<8x8xf32>
    %19 = arith.cmpf oeq, %10, %18 : vector<8x8xf32>
    %c8_i32_7 = arith.constant 8 : i32
    %20 = vector.broadcast %c8_i32_7 : i32 to vector<8x8xi32>
    %21 = arith.addi %5, %20 : vector<8x8xi32>
    %c16_i32 = arith.constant 16 : i32
    %22 = vector.broadcast %c16_i32 : i32 to vector<8x8xi32>
    %23 = arith.select %19, %21, %22 : vector<8x8xi1>, vector<8x8xi32>
    %24 = arith.select %15, %5, %23 : vector<8x8xi1>, vector<8x8xi32>
    %cst_8 = arith.constant dense<2147483647> : vector<8xi32>
    %25 = vector.multi_reduction <minsi>, %24, %cst_8 [0] : vector<8x8xi32> to vector<8xi32>
    %26 = vector.shape_cast %25 : vector<8xi32> to vector<1x8xi32>
    %c8_i32_9 = arith.constant 8 : i32
    %27 = vector.broadcast %c8_i32_9 : i32 to vector<1x8xi32>
    %28 = arith.muli %26, %27 : vector<1x8xi32>
    %29 = arith.addi %28, %9 : vector<1x8xi32>
    %c0_10 = arith.constant 0 : index
    %c0_11 = arith.constant 0 : index
    %c0_12 = arith.constant 0 : index
    %30 = vector.load %arg4[%c0_10, %c0_11, %c0_12] : memref<1x4x8xi32, #tpu.memory_space<vmem>>, vector<1x1x8xi32>
    %31 = vector.shape_cast %30 : vector<1x1x8xi32> to vector<1x8xi32>
    %32 = vector.shape_cast %29 : vector<1x8xi32> to vector<1x1x8xi32>
    tpu.vector_store %arg4[%c0_10, %c0_11, %c0_12], %32 {strides = array<i32>} : memref<1x4x8xi32, #tpu.memory_space<vmem>>, vector<1x1x8xi32>,
    %33 = vector.extract_strided_slice %4 {offsets = [8, 0], sizes = [8, 8], strides = [1, 1]} : vector<32x8xf32> to vector<8x8xf32>
    %34 = math.absf %33 : vector<8x8xf32>
    %cst_13 = arith.constant dense<0xFF800000> : vector<8xf32>
    %35 = vector.multi_reduction <maximumf>, %34, %cst_13 [0] : vector<8x8xf32> to vector<8xf32>
    %36 = vector.shape_cast %35 : vector<8xf32> to vector<1x8xf32>
    %37 = vector.broadcast %36 : vector<1x8xf32> to vector<8x8xf32>
    %38 = arith.cmpf oeq, %33, %37 : vector<8x8xf32>
    %cst_14 = arith.constant 0.000000e+00 : f32
    %39 = vector.broadcast %cst_14 : f32 to vector<1x8xf32>
    %40 = arith.subf %39, %36 : vector<1x8xf32>
    %41 = vector.broadcast %40 : vector<1x8xf32> to vector<8x8xf32>
    %42 = arith.cmpf oeq, %33, %41 : vector<8x8xf32>
    %c8_i32_15 = arith.constant 8 : i32
    %43 = vector.broadcast %c8_i32_15 : i32 to vector<8x8xi32>
    %44 = arith.addi %5, %43 : vector<8x8xi32>
    %c16_i32_16 = arith.constant 16 : i32
    %45 = vector.broadcast %c16_i32_16 : i32 to vector<8x8xi32>
    %46 = arith.select %42, %44, %45 : vector<8x8xi1>, vector<8x8xi32>
    %47 = arith.select %38, %5, %46 : vector<8x8xi1>, vector<8x8xi32>
    %cst_17 = arith.constant dense<2147483647> : vector<8xi32>
    %48 = vector.multi_reduction <minsi>, %47, %cst_17 [0] : vector<8x8xi32> to vector<8xi32>
    %49 = vector.shape_cast %48 : vector<8xi32> to vector<1x8xi32>
    %c8_i32_18 = arith.constant 8 : i32
    %50 = vector.broadcast %c8_i32_18 : i32 to vector<1x8xi32>
    %51 = arith.muli %49, %50 : vector<1x8xi32>
    %52 = arith.addi %51, %9 : vector<1x8xi32>
    %c0_19 = arith.constant 0 : index
    %c1 = arith.constant 1 : index
    %c0_20 = arith.constant 0 : index
    %53 = vector.load %arg4[%c0_19, %c1, %c0_20] : memref<1x4x8xi32, #tpu.memory_space<vmem>>, vector<1x1x8xi32>
    %54 = vector.shape_cast %53 : vector<1x1x8xi32> to vector<1x8xi32>
    %55 = vector.shape_cast %52 : vector<1x8xi32> to vector<1x1x8xi32>
    tpu.vector_store %arg4[%c0_19, %c1, %c0_20], %55 {strides = array<i32>} : memref<1x4x8xi32, #tpu.memory_space<vmem>>, vector<1x1x8xi32>,
    %56 = vector.extract_strided_slice %4 {offsets = [16, 0], sizes = [8, 8], strides = [1, 1]} : vector<32x8xf32> to vector<8x8xf32>
    %57 = math.absf %56 : vector<8x8xf32>
    %cst_21 = arith.constant dense<0xFF800000> : vector<8xf32>
    %58 = vector.multi_reduction <maximumf>, %57, %cst_21 [0] : vector<8x8xf32> to vector<8xf32>
    %59 = vector.shape_cast %58 : vector<8xf32> to vector<1x8xf32>
    %60 = vector.broadcast %59 : vector<1x8xf32> to vector<8x8xf32>
    %61 = arith.cmpf oeq, %56, %60 : vector<8x8xf32>
    %cst_22 = arith.constant 0.000000e+00 : f32
    %62 = vector.broadcast %cst_22 : f32 to vector<1x8xf32>
    %63 = arith.subf %62, %59 : vector<1x8xf32>
    %64 = vector.broadcast %63 : vector<1x8xf32> to vector<8x8xf32>
    %65 = arith.cmpf oeq, %56, %64 : vector<8x8xf32>
    %c8_i32_23 = arith.constant 8 : i32
    %66 = vector.broadcast %c8_i32_23 : i32 to vector<8x8xi32>
    %67 = arith.addi %5, %66 : vector<8x8xi32>
    %c16_i32_24 = arith.constant 16 : i32
    %68 = vector.broadcast %c16_i32_24 : i32 to vector<8x8xi32>
    %69 = arith.select %65, %67, %68 : vector<8x8xi1>, vector<8x8xi32>
    %70 = arith.select %61, %5, %69 : vector<8x8xi1>, vector<8x8xi32>
    %cst_25 = arith.constant dense<2147483647> : vector<8xi32>
    %71 = vector.multi_reduction <minsi>, %70, %cst_25 [0] : vector<8x8xi32> to vector<8xi32>
    %72 = vector.shape_cast %71 : vector<8xi32> to vector<1x8xi32>
    %c8_i32_26 = arith.constant 8 : i32
    %73 = vector.broadcast %c8_i32_26 : i32 to vector<1x8xi32>
    %74 = arith.muli %72, %73 : vector<1x8xi32>
    %75 = arith.addi %74, %9 : vector<1x8xi32>
    %c0_27 = arith.constant 0 : index
    %c2 = arith.constant 2 : index
    %c0_28 = arith.constant 0 : index
    %76 = vector.load %arg4[%c0_27, %c2, %c0_28] : memref<1x4x8xi32, #tpu.memory_space<vmem>>, vector<1x1x8xi32>
    %77 = vector.shape_cast %76 : vector<1x1x8xi32> to vector<1x8xi32>
    %78 = vector.shape_cast %75 : vector<1x8xi32> to vector<1x1x8xi32>
    tpu.vector_store %arg4[%c0_27, %c2, %c0_28], %78 {strides = array<i32>} : memref<1x4x8xi32, #tpu.memory_space<vmem>>, vector<1x1x8xi32>,
    %79 = vector.extract_strided_slice %4 {offsets = [24, 0], sizes = [8, 8], strides = [1, 1]} : vector<32x8xf32> to vector<8x8xf32>
    %80 = math.absf %79 : vector<8x8xf32>
    %cst_29 = arith.constant dense<0xFF800000> : vector<8xf32>
    %81 = vector.multi_reduction <maximumf>, %80, %cst_29 [0] : vector<8x8xf32> to vector<8xf32>
    %82 = vector.shape_cast %81 : vector<8xf32> to vector<1x8xf32>
    %83 = vector.broadcast %82 : vector<1x8xf32> to vector<8x8xf32>
    %84 = arith.cmpf oeq, %79, %83 : vector<8x8xf32>
    %cst_30 = arith.constant 0.000000e+00 : f32
    %85 = vector.broadcast %cst_30 : f32 to vector<1x8xf32>
    %86 = arith.subf %85, %82 : vector<1x8xf32>
    %87 = vector.broadcast %86 : vector<1x8xf32> to vector<8x8xf32>
    %88 = arith.cmpf oeq, %79, %87 : vector<8x8xf32>
    %c8_i32_31 = arith.constant 8 : i32
    %89 = vector.broadcast %c8_i32_31 : i32 to vector<8x8xi32>
    %90 = arith.addi %5, %89 : vector<8x8xi32>
    %c16_i32_32 = arith.constant 16 : i32
    %91 = vector.broadcast %c16_i32_32 : i32 to vector<8x8xi32>
    %92 = arith.select %88, %90, %91 : vector<8x8xi1>, vector<8x8xi32>
    %93 = arith.select %84, %5, %92 : vector<8x8xi1>, vector<8x8xi32>
    %cst_33 = arith.constant dense<2147483647> : vector<8xi32>
    %94 = vector.multi_reduction <minsi>, %93, %cst_33 [0] : vector<8x8xi32> to vector<8xi32>
    %95 = vector.shape_cast %94 : vector<8xi32> to vector<1x8xi32>
    %c8_i32_34 = arith.constant 8 : i32
    %96 = vector.broadcast %c8_i32_34 : i32 to vector<1x8xi32>
    %97 = arith.muli %95, %96 : vector<1x8xi32>
    %98 = arith.addi %97, %9 : vector<1x8xi32>
    %c0_35 = arith.constant 0 : index
    %c3 = arith.constant 3 : index
    %c0_36 = arith.constant 0 : index
    %99 = vector.load %arg4[%c0_35, %c3, %c0_36] : memref<1x4x8xi32, #tpu.memory_space<vmem>>, vector<1x1x8xi32>
    %100 = vector.shape_cast %99 : vector<1x1x8xi32> to vector<1x8xi32>
    %101 = vector.shape_cast %98 : vector<1x8xi32> to vector<1x1x8xi32>
    tpu.vector_store %arg4[%c0_35, %c3, %c0_36], %101 {strides = array<i32>} : memref<1x4x8xi32, #tpu.memory_space<vmem>>, vector<1x1x8xi32>,
    return
  }
  func.func @transform_0(%arg0: i32, %arg1: i32) -> (i32, i32, i32) {
    %c0_i32 = arith.constant 0 : i32
    %c0_i32_0 = arith.constant 0 : i32
    return %arg0, %arg1, %c0_i32 : i32, i32, i32
  }
  func.func @transform_1(%arg0: i32, %arg1: i32) -> (i32, i32, i32) {
    %c0_i32 = arith.constant 0 : i32
    %c0_i32_0 = arith.constant 0 : i32
    %c0_i32_1 = arith.constant 0 : i32
    return %arg0, %c0_i32, %c0_i32_0 : i32, i32, i32
  }
  func.func @transform_2(%arg0: i32, %arg1: i32) -> (i32, i32, i32) {
    %c0_i32 = arith.constant 0 : i32
    %c0_i32_0 = arith.constant 0 : i32
    return %arg0, %c0_i32, %arg1 : i32, i32, i32
  }
}

</mosaic_0001>

<llo_original>
// kernel: tpu_custom_call.1
$region0: #{tpu_custom_call.1}
  #allocation0 [shape = 'u32[]', space=smem, size = 0x4, offset = 0x4, fixed_abs, tag = 'smem constant byte address 0x4 - core index']
  #allocation1 [shape = 'u32[144,128]{1,0:T(1,128)}', space=vmem, size = 0x12000, scoped, tag = 'internal scratch']
  %s0 = inlined_call_operand.hbm [shape: f32[2,8,32], index: 0, kind: input, shape index: {}]
  %s1 = inlined_call_operand.hbm [shape: f32[2,32,32], index: 1, kind: input, shape index: {}]
  %s2 = inlined_call_operand.hbm [shape: s32[2,4,8], index: 2, kind: output, shape index: {}]
  %s3 = sld [smem:[#allocation0]]
  $region49: #{tpu_custom_call.1} parent=0
    _
  %s5 = ssub.s32 1, %s3
  %s6 = scalar_select 0, %s5, %s3
  $region1: #{tpu_custom_call.1} parent=0
    #allocation2 [shape = 'u8[8192]{0}', space=vmem, size = 0x2000, scoped, tag = 'input window, operand 0']
    #allocation3 [shape = 's32[2]{0}', space=sflag, size = 0x8, scoped, tag = 'scoped memory for tpu_custom_call.1']
    #allocation4 [shape = 's32[2]{0}', space=sflag, size = 0x8, scoped, tag = 'scoped memory for tpu_custom_call.1']
    #allocation5 [shape = 'u8[32768]{0}', space=vmem, size = 0x8000, scoped, tag = 'input window, operand 1']
    #allocation6 [shape = 's32[2]{0}', space=sflag, size = 0x8, scoped, tag = 'scoped memory for tpu_custom_call.1']
    #allocation7 [shape = 'u8[4096]{0}', space=vmem, size = 0x1000, scoped, tag = 'output window, operand 0']
    %7 = vsyncpa [#allocation3], 0
    %s8 = scalar_lea.sflag [#allocation3], 1
    %9 = vsyncpa %s8, 0
    %10 = vsyncpa [#allocation6], 0
    %s11 = scalar_lea.sflag [#allocation6], 1
    %12 = vsyncpa %s11, 0
    %13 = vsyncpa [#allocation4], 0
    %s14 = scalar_lea.sflag [#allocation4], 1
    %15 = vsyncpa %s14, 0
    loop: start=0, step=1, limit=4
    $region2: #{tpu_custom_call.1} parent=1 // loop_pre_header
      _
    $region3: #{tpu_custom_call.1} parent=1 // loop_header
      %s17 = sphi 0, %s21
      %p18 = scmp.ge.s32.totalorder %s17, 4
      %s24 = sphi 0, %s36
      %s25 = sphi 0, %s32
      %s26 = sphi 0, %s24
      %s27 = sphi 0, %s25
      %s28 = sphi 0, %s26
      %s29 = sphi 0, %s27
      %s41 = sphi 0, %s43
      %s44 = sphi 0, %s41
      %s45 = sphi 0, %s44
      %s61 = sphi 0, %s45
      %s67 = sphi 0, %s69
      %s70 = sphi 0, %s67
      %s71 = sphi 0, %s70
      %s87 = sphi 0, %s71
      %s95 = sphi 0, %s97
      %s98 = sphi 0, %s95
      %s99 = sphi 0, %s98
      %s115 = sphi 0, %s99
    $region4: #{tpu_custom_call.1} parent=1 // loop_header_branch
      %20 = sbr.rel (%p18) target = $region8
    $region5: #{tpu_custom_call.1} parent=1 // loop_body
      %s22 = ssub.s32 %s17, 1
      %s23 = ssub.s32 %s17, 2
      %s30 = sadd.s32 1, %s25
      %p31 = scmp.ge.s32.totalorder %s30, 1
      %s32 = scalar_select %p31, 0, %s30
      %s33 = sadd.s32 1, %s24
      %s34 = scalar_select %p31, %s33, %s24
      %p35 = scmp.ge.s32.totalorder %s34, 2
      %s36 = scalar_select %p35, 0, %s34
      %s37 = ssub.s32 %s24, %s36
      %s38 = ssub.s32 %s25, %s32
      %s39 = sor.u32 %s37, %s38
      %p40 = scmp.eq.s32.totalorder %s39, 0
      %s42 = sadd.s32 %s41, 1
      %s43 = scalar_select %p40, %s41, %s42
      %p46 = pneg %p40
      %p47 = scmp.eq.s32.totalorder %s17, 1
      %p48 = por %p46, %p47
      %p49 = scmp.ne.s32.totalorder %s41, %s44
      %p50 = scmp.eq.s32.totalorder %s17, 0
      %p51 = por %p49, %p50
      %p52 = scmp.ne.s32.totalorder %s41, %s44
      %p53 = scmp.eq.s32.totalorder %s22, 1
      %p54 = por %p52, %p53
      %p55 = scmp.ne.s32.totalorder %s44, %s45
      %p56 = scmp.eq.s32.totalorder %s22, 0
      %p57 = por %p55, %p56
      %p58 = scmp.ne.s32.totalorder %s44, %s45
      %p59 = scmp.eq.s32.totalorder %s23, 1
      %p60 = por %p58, %p59
      %p62 = scmp.ne.s32.totalorder %s45, %s61
      %p63 = scmp.eq.s32.totalorder %s23, 0
      %p64 = por %p62, %p63
      %s65 = ssub.s32 %s24, %s36
      %p66 = scmp.eq.s32.totalorder %s65, 0
      %s68 = sadd.s32 %s67, 1
      %s69 = scalar_select %p66, %s67, %s68
      %p72 = pneg %p66
      %p73 = scmp.eq.s32.totalorder %s17, 1
      %p74 = por %p72, %p73
      %p75 = scmp.ne.s32.totalorder %s67, %s70
      %p76 = scmp.eq.s32.totalorder %s17, 0
      %p77 = por %p75, %p76
      %p78 = scmp.ne.s32.totalorder %s67, %s70
      %p79 = scmp.eq.s32.totalorder %s22, 1
      %p80 = por %p78, %p79
      %p81 = scmp.ne.s32.totalorder %s70, %s71
      %p82 = scmp.eq.s32.totalorder %s22, 0
      %p83 = por %p81, %p82
      %p84 = scmp.ne.s32.totalorder %s70, %s71
      %p85 = scmp.eq.s32.totalorder %s23, 1
      %p86 = por %p84, %p85
      %p88 = scmp.ne.s32.totalorder %s71, %s87
      %p89 = scmp.eq.s32.totalorder %s23, 0
      %p90 = por %p88, %p89
      %s91 = ssub.s32 %s24, %s36
      %s92 = ssub.s32 %s25, %s32
      %s93 = sor.u32 %s91, %s92
      %p94 = scmp.eq.s32.totalorder %s93, 0
      %s96 = sadd.s32 %s95, 1
      %s97 = scalar_select %p94, %s95, %s96
      %p100 = pneg %p94
      %p101 = scmp.eq.s32.totalorder %s17, 1
      %p102 = por %p100, %p101
      %p103 = scmp.ne.s32.totalorder %s95, %s98
      %p104 = scmp.eq.s32.totalorder %s17, 0
      %p105 = por %p103, %p104
      %p106 = scmp.ne.s32.totalorder %s95, %s98
      %p107 = scmp.eq.s32.totalorder %s22, 1
      %p108 = por %p106, %p107
      %p109 = scmp.ne.s32.totalorder %s98, %s99
      %p110 = scmp.eq.s32.totalorder %s22, 0
      %p111 = por %p109, %p110
      %p112 = scmp.ne.s32.totalorder %s98, %s99
      %p113 = scmp.eq.s32.totalorder %s23, 1
      %p114 = por %p112, %p113
      %p116 = scmp.ne.s32.totalorder %s99, %s115
      %p117 = scmp.eq.s32.totalorder %s23, 0
      %p118 = por %p116, %p117
      %p119 = scmp.le.s32.totalorder 1, %s17
      %p120 = scmp.lt.s32.totalorder %s17, 3
      %p121 = pnand %p119, %p120
      %p122 = pneg %p121
      // Predicated region
      $region9: #{tpu_custom_call.1} parent=5 // pred_check
        _
      $region10: #{tpu_custom_call.1} parent=5 // pred_check_branch
        %124 = sbr.rel (%p121) target = $region12
      $region11: #{tpu_custom_call.1} parent=5 // pred_region
        %s125 = ssub.s32 %s17, 1
      $region12: #{tpu_custom_call.1} parent=5 // pred_fallthru
        _
      %p126 = scmp.lt.s32.totalorder %s17, 2
      // Predicated region
      $region13: #{tpu_custom_call.1} parent=5 // pred_check
        %p127 = pneg %p126
      $region14: #{tpu_custom_call.1} parent=5 // pred_check_branch
        %129 = sbr.rel (%p127) target = $region16
      $region15: #{tpu_custom_call.1} parent=5 // pred_region
        // Predicated region
        $region17: #{tpu_custom_call.1} parent=15 // pred_check
          %p130 = pneg %p51
        $region18: #{tpu_custom_call.1} parent=15 // pred_check_branch
          %132 = sbr.rel (%p130) target = $region20
        $region19: #{tpu_custom_call.1} parent=15 // pred_region
          %s133 = sand.u32 %s41, 1
          %s134 = scalar_lea.sflag [#allocation3], %s133
          %s135 = sand.u32 %s41, 1
          %s136 = smul.addr %s135, 8
          %s137 = scalar_lea.vmem [#allocation2], %s136
          %s139 = ssub.s32 128, 128
          %140 = vsyncadd %s134, %s139
          %s141 = sadd.s32 %s25, %s24
          %s142 = smul.addr %s141, 128
          %s143 = scalar_lea.hbm %s0, %s142
          %s145 = sshll.u32 %s137, 4
          %s146 = int_to_ptr.vmem [resolvable:$true] %s145
          %148 = dma.hbm_to_vmem [thread:$0]  %s143, 128, %s146, %s134
        $region20: #{tpu_custom_call.1} parent=15 // pred_fallthru
          _
        // Predicated region
        $region21: #{tpu_custom_call.1} parent=15 // pred_check
          %p149 = pneg %p77
        $region22: #{tpu_custom_call.1} parent=15 // pred_check_branch
          %151 = sbr.rel (%p149) target = $region24
        $region23: #{tpu_custom_call.1} parent=15 // pred_region
          %s152 = sand.u32 %s67, 1
          %s153 = scalar_lea.sflag [#allocation6], %s152
          %s154 = sand.u32 %s67, 1
          %s155 = smul.addr %s154, 32
          %s156 = scalar_lea.vmem [#allocation5], %s155
          %s158 = ssub.s32 512, 512
          %159 = vsyncadd %s153, %s158
          %s160 = smul.addr %s24, 4
          %s161 = smul.addr %s160, 128
          %s162 = scalar_lea.hbm %s1, %s161
          %s163 = sshll.u32 %s156, 4
          %s164 = int_to_ptr.vmem [resolvable:$true] %s163
          %169 = dma.hbm_to_vmem [thread:$0]  %s162, 512, %s164, %s153, 128, 128, 8
        $region24: #{tpu_custom_call.1} parent=15 // pred_fallthru
          _
      $region16: #{tpu_custom_call.1} parent=5 // pred_fallthru
        _
      %p170 = scmp.le.s32.totalorder 1, %s17
      %p171 = scmp.lt.s32.totalorder %s17, 3
      %p172 = pnand %p170, %p171
      %p173 = pneg %p172
      // Predicated region
      $region25: #{tpu_custom_call.1} parent=5 // pred_check
        _
      $region26: #{tpu_custom_call.1} parent=5 // pred_check_branch
        %175 = sbr.rel (%p172) target = $region28
      $region27: #{tpu_custom_call.1} parent=5 // pred_region
        %s176 = ssub.s32 %s17, 1
        %s177 = sand.u32 %s44, 1
        %s178 = scalar_lea.sflag [#allocation3], %s177
        %s179 = sand.u32 %s44, 1
        %s180 = smul.addr %s179, 8
        %s181 = scalar_lea.vmem [#allocation2], %s180
        // Predicated region
        $region29: #{tpu_custom_call.1} parent=27 // pred_check
          %p182 = pneg %p57
        $region30: #{tpu_custom_call.1} parent=27 // pred_check_branch
          %184 = sbr.rel (%p182) target = $region32
        $region31: #{tpu_custom_call.1} parent=27 // pred_region
          %185 = dma.done %s178, 128
        $region32: #{tpu_custom_call.1} parent=27 // pred_fallthru
          _
        %s186 = sand.u32 %s70, 1
        %s187 = scalar_lea.sflag [#allocation6], %s186
        %s188 = sand.u32 %s70, 1
        %s189 = smul.addr %s188, 32
        %s190 = scalar_lea.vmem [#allocation5], %s189
        // Predicated region
        $region33: #{tpu_custom_call.1} parent=27 // pred_check
          %p191 = pneg %p83
        $region34: #{tpu_custom_call.1} parent=27 // pred_check_branch
          %193 = sbr.rel (%p191) target = $region36
        $region35: #{tpu_custom_call.1} parent=27 // pred_region
          %194 = dma.done %s187, 512
        $region36: #{tpu_custom_call.1} parent=27 // pred_fallthru
          _
        %s195 = sand.u32 %s44, 1
        %s196 = scalar_lea.sflag [#allocation3], %s195
        %s197 = sand.u32 %s44, 1
        %s198 = smul.addr %s197, 8
        %s199 = scalar_lea.vmem [#allocation2], %s198
        %p200 = pneg %p57
        %p201 = pneg %p54
        %s202 = sand.u32 %s70, 1
        %s203 = scalar_lea.sflag [#allocation6], %s202
        %s204 = sand.u32 %s70, 1
        %s205 = smul.addr %s204, 32
        %s206 = scalar_lea.vmem [#allocation5], %s205
        %p207 = pneg %p83
        %p208 = pneg %p80
        %p209 = pneg %p111
        %p210 = pneg %p108
        %s211 = sand.u32 %s98, 1
        %s212 = scalar_lea.sflag [#allocation4], %s211
        %s213 = sand.u32 %s98, 1
        %s214 = smul.addr %s213, 4
        %s215 = scalar_lea.vmem [#allocation7], %s214
        %v216 = vld [vmem:[%s181] sm:$0xff]
        %v217 = vld [vmem:[%s190] sm:$0xff]
        %v218 = vld [vmem:[%s190 + $0x8] sm:$0xff]
        %v219 = vld [vmem:[%s190 + $0x10] sm:$0xff]
        %v220 = vld [vmem:[%s190 + $0x18] sm:$0xff]
        %vm221 = vcmask 261120
        %v223 = vsel %vm221, %v217, 0
        %v226 = vsel %vm221, %v218, 0
        %v229 = vsel %vm221, %v219, 0
        %v232 = vsel %vm221, %v220, 0
        %v235 = vsel %vm221, %v216, 0
        %237 = vmatprep.subr.mxu0 0.0
        %238 = vmatpush1.xpose.msra.mxu0 %v235
        %239 = vmatprep.subr.mxu0 0.0
        %240 = vmatpush1.xpose.msra.mxu0 0.0
        %241 = vmatprep.subr.mxu0 0.0
        %242 = vmatpush1.xpose.msra.mxu0 0.0
        %243 = vmatprep.subr.mxu0 0.0
        %244 = vmatpush1.xpose.msra.mxu0 0.0
        %245 = vmatprep.subr.mxu0 0.0
        %246 = vmatpush1.xpose.msra.mxu0 0.0
        %247 = vmatprep.subr.mxu0 0.0
        %248 = vmatpush1.xpose.msra.mxu0 0.0
        %249 = vmatprep.subr.mxu0 0.0
        %250 = vmatpush1.xpose.msra.mxu0 0.0
        %251 = vmatprep.subr.mxu0 0.0
        %252 = vmatpush1.xpose.msra.mxu0 0.0
        %253 = vmatprep.subr.mxu0 0.0
        %254 = vmatpush1.xpose.msra.mxu0 0.0
        %255 = vmatprep.subr.mxu0 0.0
        %256 = vmatpush1.xpose.msra.mxu0 0.0
        %257 = vmatprep.subr.mxu0 0.0
        %258 = vmatpush1.xpose.msra.mxu0 0.0
        %259 = vmatprep.subr.mxu0 0.0
        %260 = vmatpush1.xpose.msra.mxu0 0.0
        %261 = vmatprep.subr.mxu0 0.0
        %262 = vmatpush1.xpose.msra.mxu0 0.0
        %263 = vmatprep.subr.mxu0 0.0
        %264 = vmatpush1.xpose.msra.mxu0 0.0
        %265 = vmatprep.subr.mxu0 0.0
        %266 = vmatpush1.xpose.msra.mxu0 0.0
        %267 = vmatprep.subr.mxu0 0.0
        %268 = vmatpush1.xpose.msra.mxu0 0.0
        %269 = vmatprep.subr.mxu0 0.0
        %270 = vmatpush1.xpose.msra.mxu0 0.0
        %271 = vmatprep.subr.mxu0 0.0
        %272 = vmatpush1.xpose.msra.mxu0 0.0
        %273 = vmatprep.subr.mxu0 0.0
        %274 = vmatpush1.xpose.msra.mxu0 0.0
        %275 = vmatprep.subr.mxu0 0.0
        %276 = vmatpush1.xpose.msra.mxu0 0.0
        %277 = vmatprep.subr.mxu0 0.0
        %278 = vmatpush1.xpose.msra.mxu0 0.0
        %279 = vmatprep.subr.mxu0 0.0
        %280 = vmatpush1.xpose.msra.mxu0 0.0
        %281 = vmatprep.subr.mxu0 0.0
        %282 = vmatpush1.xpose.msra.mxu0 0.0
        %283 = vmatprep.subr.mxu0 0.0
        %284 = vmatpush1.xpose.msra.mxu0 0.0
        %285 = vmatprep.subr.mxu0 0.0
        %286 = vmatpush1.xpose.msra.mxu0 0.0
        %287 = vmatprep.subr.mxu0 0.0
        %288 = vmatpush1.xpose.msra.mxu0 0.0
        %289 = vmatprep.subr.mxu0 0.0
        %290 = vmatpush1.xpose.msra.mxu0 0.0
        %291 = vmatprep.subr.mxu0 0.0
        %292 = vmatpush1.xpose.msra.mxu0 0.0
        %293 = vmatprep.subr.mxu0 0.0
        %294 = vmatpush1.xpose.msra.mxu0 0.0
        %295 = vmatprep.subr.mxu0 0.0
        %296 = vmatpush1.xpose.msra.mxu0 0.0
        %297 = vmatprep.subr.mxu0 0.0
        %298 = vmatpush1.xpose.msra.mxu0 0.0
        %299 = vmatprep.subr.mxu0 0.0
        %300 = vmatpush1.xpose.msra.mxu0 0.0
        %301 = vmatprep.mubr.f32.mxu0 0.0
        %302 = vmatmul.mubr.f32.gmra.mrb[0].mxu0 %v223
        %v303 = vpop.f32.mrb[0].mxu0
        %v304 = vadd.f32 0.0, %v303
        %v305 = vpop.f32.mrb[0].mxu0
        %306 = vmatprep.mubr.f32.mxu0 0.0
        %307 = vmatmul.mubr.f32.gmra.mrb[0].mxu0 %v226
        %v308 = vpop.f32.mrb[0].mxu0
        %v309 = vadd.f32 0.0, %v308
        %v310 = vpop.f32.mrb[0].mxu0
        %311 = vmatprep.mubr.f32.mxu0 0.0
        %312 = vmatmul.mubr.f32.gmra.mrb[0].mxu0 %v229
        %v313 = vpop.f32.mrb[0].mxu0
        %v314 = vadd.f32 0.0, %v313
        %v315 = vpop.f32.mrb[0].mxu0
        %316 = vmatprep.mubr.f32.mxu0 0.0
        %317 = vmatmul.mubr.f32.gmra.mrb[0].mxu0 %v232
        %v318 = vpop.f32.mrb[0].mxu0
        %v319 = vadd.f32 0.0, %v318
        %v320 = vpop.f32.mrb[0].mxu0
        %321 = vdwg.mxu0
        %v322 = vlaneseq
        %v323 = vshrl.u32 %v322, 7
        %s324 = smul.u32 %s27, 8
        %v325 = vlaneseq
        %v326 = vand.u32 %v325, 127
        %v327 = vstv %s324
        %v328 = vadd.s32 %v327, %v326
        %v329 = vand.u32 2147483647, %v304
        %vm330 = vcmask 64512
        %v331 = vsel %vm330, %v329, -inf
        %v332 = vrot.slane %v331, 4
        %v333 = vmax.f32 %v331, %v332
        %v334 = vrot.slane %v333, 2
        %v335 = vmax.f32 %v333, %v334
        %v336 = vrot.slane %v335, 1
        %v337 = vmax.f32 %v335, %v336
        %vm338 = vcmp.eq.f32.partialorder %v304, %v337
        %v339 = vsub.f32 0.0, %v337
        %vm340 = vcmp.eq.f32.partialorder %v304, %v339
        %v341 = vadd.s32 %v323, 8
        %v342 = vsel %vm340, %v341, 16
        %v343 = vsel %vm338, %v323, %v342
        %v344 = vsel %vm330, %v343, 2147483647
        %v345 = vrot.slane %v344, 4
        %vm346 = vcmp.lt.s32.totalorder %v344, %v345
        %v347 = vsel %vm346, %v344, %v345
        %v348 = vrot.slane %v347, 2
        %vm349 = vcmp.lt.s32.totalorder %v347, %v348
        %v350 = vsel %vm349, %v347, %v348
        %v351 = vrot.slane %v350, 1
        %vm352 = vcmp.lt.s32.totalorder %v350, %v351
        %v353 = vsel %vm352, %v350, %v351
        %v354 = vmul.u32 %v353, 8
        %v355 = vadd.s32 %v354, %v328
        %vm356 = vcmask 57344
        %357 = vst.msk [vmem:[%s215] sm:$0x1] %vm356, %v355
        %v358 = vand.u32 2147483647, %v309
        %v359 = vsel %vm330, %v358, -inf
        %v360 = vrot.slane %v359, 4
        %v361 = vmax.f32 %v359, %v360
        %v362 = vrot.slane %v361, 2
        %v363 = vmax.f32 %v361, %v362
        %v364 = vrot.slane %v363, 1
        %v365 = vmax.f32 %v363, %v364
        %vm366 = vcmp.eq.f32.partialorder %v309, %v365
        %v367 = vsub.f32 0.0, %v365
        %vm368 = vcmp.eq.f32.partialorder %v309, %v367
        %v369 = vsel %vm368, %v341, 16
        %v370 = vsel %vm366, %v323, %v369
        %v371 = vsel %vm330, %v370, 2147483647
        %v372 = vrot.slane %v371, 4
        %vm373 = vcmp.lt.s32.totalorder %v371, %v372
        %v374 = vsel %vm373, %v371, %v372
        %v375 = vrot.slane %v374, 2
        %vm376 = vcmp.lt.s32.totalorder %v374, %v375
        %v377 = vsel %vm376, %v374, %v375
        %v378 = vrot.slane %v377, 1
        %vm379 = vcmp.lt.s32.totalorder %v377, %v378
        %v380 = vsel %vm379, %v377, %v378
        %v381 = vmul.u32 %v380, 8
        %v382 = vadd.s32 %v381, %v328
        %383 = vst.msk [vmem:[%s215 + $0x1] sm:$0x1] %vm356, %v382
        %v384 = vand.u32 2147483647, %v314
        %v385 = vsel %vm330, %v384, -inf
        %v386 = vrot.slane %v385, 4
        %v387 = vmax.f32 %v385, %v386
        %v388 = vrot.slane %v387, 2
        %v389 = vmax.f32 %v387, %v388
        %v390 = vrot.slane %v389, 1
        %v391 = vmax.f32 %v389, %v390
        %vm392 = vcmp.eq.f32.partialorder %v314, %v391
        %v393 = vsub.f32 0.0, %v391
        %vm394 = vcmp.eq.f32.partialorder %v314, %v393
        %v395 = vsel %vm394, %v341, 16
        %v396 = vsel %vm392, %v323, %v395
        %v397 = vsel %vm330, %v396, 2147483647
        %v398 = vrot.slane %v397, 4
        %vm399 = vcmp.lt.s32.totalorder %v397, %v398
        %v400 = vsel %vm399, %v397, %v398
        %v401 = vrot.slane %v400, 2
        %vm402 = vcmp.lt.s32.totalorder %v400, %v401
        %v403 = vsel %vm402, %v400, %v401
        %v404 = vrot.slane %v403, 1
        %vm405 = vcmp.lt.s32.totalorder %v403, %v404
        %v406 = vsel %vm405, %v403, %v404
        %v407 = vmul.u32 %v406, 8
        %v408 = vadd.s32 %v407, %v328
        %409 = vst.msk [vmem:[%s215 + $0x2] sm:$0x1] %vm356, %v408
        %v410 = vand.u32 2147483647, %v319
        %v411 = vsel %vm330, %v410, -inf
        %v412 = vrot.slane %v411, 4
        %v413 = vmax.f32 %v411, %v412
        %v414 = vrot.slane %v413, 2
        %v415 = vmax.f32 %v413, %v414
        %v416 = vrot.slane %v415, 1
        %v417 = vmax.f32 %v415, %v416
        %vm418 = vcmp.eq.f32.partialorder %v319, %v417
        %v419 = vsub.f32 0.0, %v417
        %vm420 = vcmp.eq.f32.partialorder %v319, %v419
        %v421 = vsel %vm420, %v341, 16
        %v422 = vsel %vm418, %v323, %v421
        %v423 = vsel %vm330, %v422, 2147483647
        %v424 = vrot.slane %v423, 4
        %vm425 = vcmp.lt.s32.totalorder %v423, %v424
        %v426 = vsel %vm425, %v423, %v424
        %v427 = vrot.slane %v426, 2
        %vm428 = vcmp.lt.s32.totalorder %v426, %v427
        %v429 = vsel %vm428, %v426, %v427
        %v430 = vrot.slane %v429, 1
        %vm431 = vcmp.lt.s32.totalorder %v429, %v430
        %v432 = vsel %vm431, %v429, %v430
        %v433 = vmul.u32 %v432, 8
        %v434 = vadd.s32 %v433, %v328
        %435 = vst.msk [vmem:[%s215 + $0x3] sm:$0x1] %vm356, %v434
        %s436 = sand.u32 %s98, 1
        %s437 = scalar_lea.sflag [#allocation4], %s436
        %s438 = sand.u32 %s98, 1
        %s439 = smul.addr %s438, 4
        %s440 = scalar_lea.vmem [#allocation7], %s439
        // Predicated region
        $region37: #{tpu_custom_call.1} parent=27 // pred_check
          %p441 = pneg %p108
        $region38: #{tpu_custom_call.1} parent=27 // pred_check_branch
          %443 = sbr.rel (%p441) target = $region40
        $region39: #{tpu_custom_call.1} parent=27 // pred_region
          %s445 = ssub.s32 64, 64
          %446 = vsyncadd %s437, %s445
          %s447 = sadd.s32 %s27, %s26
          %s448 = smul.addr %s447, 64
          %s449 = scalar_lea.hbm %s2, %s448
          %s451 = sshll.u32 %s440, 4
          %s452 = int_to_ptr.vmem [resolvable:$true] %s451
          %454 = dma.vmem_to_hbm [thread:$0]  %s452, 64, %s449, %s437
        $region40: #{tpu_custom_call.1} parent=27 // pred_fallthru
          _
      $region28: #{tpu_custom_call.1} parent=5 // pred_fallthru
        _
      %p455 = scmp.le.s32.totalorder 2, %s17
      // Predicated region
      $region41: #{tpu_custom_call.1} parent=5 // pred_check
        %p456 = pneg %p455
      $region42: #{tpu_custom_call.1} parent=5 // pred_check_branch
        %458 = sbr.rel (%p456) target = $region44
      $region43: #{tpu_custom_call.1} parent=5 // pred_region
        %s459 = ssub.s32 %s17, 2
        // Predicated region
        $region45: #{tpu_custom_call.1} parent=43 // pred_check
          %p460 = pneg %p114
        $region46: #{tpu_custom_call.1} parent=43 // pred_check_branch
          %462 = sbr.rel (%p460) target = $region48
        $region47: #{tpu_custom_call.1} parent=43 // pred_region
          %s463 = sand.u32 %s99, 1
          %s464 = scalar_lea.sflag [#allocation4], %s463
          %s465 = sand.u32 %s99, 1
          %s466 = smul.addr %s465, 4
          %s467 = scalar_lea.vmem [#allocation7], %s466
          %468 = dma.done %s464, 64
        $region48: #{tpu_custom_call.1} parent=43 // pred_fallthru
          _
      $region44: #{tpu_custom_call.1} parent=5 // pred_fallthru
        _
    $region6: #{tpu_custom_call.1} parent=1 // loop_footer
      %s21 = sadd.s32 1, %s17
    $region7: #{tpu_custom_call.1} parent=1 // loop_footer_branch
      %16 = sbr.rel target = $region3
    $region8: #{tpu_custom_call.1} parent=1 // loop_exit
      _
    %469 = vsyncpa [#allocation3], 1
    %s470 = scalar_lea.sflag [#allocation3], 1
    %471 = vsyncpa %s470, 1
    %472 = vsyncpa [#allocation6], 1
    %s473 = scalar_lea.sflag [#allocation6], 1
    %474 = vsyncpa %s473, 1
    %475 = vsyncpa [#allocation4], 1
    %s476 = scalar_lea.sflag [#allocation4], 1
    %477 = vsyncpa %s476, 1

</llo_original>
